<compile_context>
chip_gen: v6e
topology: v6e:2x2x1
jax: 0.10.0
libtpu: 0.0.40
codegen_flags: <defaults>
</compile_context>

<pallas_src>
import functools

import jax
import jax.numpy as jnp
import numpy as np
from jax import lax
from jax.experimental import pallas as pl
from jax.experimental.pallas import tpu as pltpu


def _round_up(x, m):
    return -(-x // m) * m


def _vae_attn_kernel(means_ref, logvars_ref, gt_ref, hat_ref,
                     kld_ref, num_ref, den_ref,
                     *, alpha, n_valid, nt, n_inner, mask_start, need_mask):
    """One grid step.

    Grid: (n_outer, num_bt, n_inner) with semantics ("parallel", "parallel",
    "arbitrary").  The column-reduction axis is last; the num/den output
    blocks are resident across it and accumulate per-row partial sums.  KLD is
    computed once per batch tile (j == 0) from the resident means/logvars
    block.
    """
    o = pl.program_id(0)
    j = pl.program_id(2)
    g = o * n_inner + j                        # global column-tile index

    @pl.when(j == 0)
    def _init():
        m = means_ref[...].astype(jnp.float32)
        lv = logvars_ref[...].astype(jnp.float32)
        kld_ref[...] = -0.5 * jnp.sum(1.0 + lv - m * m - jnp.exp(lv),
                                      axis=-1, keepdims=True)
        num_ref[...] = jnp.zeros_like(num_ref)
        den_ref[...] = jnp.zeros_like(den_ref)

    def _partials():
        gt = gt_ref[...].astype(jnp.float32)
        hat = hat_ref[...].astype(jnp.float32)
        diff = gt - hat
        aw = jnp.exp(gt * alpha)               # EUP
        return diff * diff * aw, aw

    def _accum_fast():
        num_c, den_c = _partials()
        num_ref[...] += jnp.sum(num_c, axis=-1, keepdims=True)   # XLU row sum
        den_ref[...] += jnp.sum(den_c, axis=-1, keepdims=True)

    if not need_mask:
        _accum_fast()
    else:
        # Interior tiles take the cheap unmasked path; only the ragged last
        # tile (and clamped duplicate tiles from the outer N split) pays for
        # the iota/compare/select.  The mask is applied to the SUMMANDS so
        # garbage (possibly NaN/Inf) in the out-of-bounds region of the block
        # cannot poison the row sums.
        @pl.when(g < mask_start)
        def _fast():
            _accum_fast()

        @pl.when(g >= mask_start)
        def _masked():
            num_c, den_c = _partials()
            col = g * nt + lax.broadcasted_iota(jnp.int32, num_c.shape, 1)
            keep = col < n_valid
            num_ref[...] += jnp.sum(jnp.where(keep, num_c, 0.0),
                                    axis=-1, keepdims=True)
            den_ref[...] += jnp.sum(jnp.where(keep, den_c, 0.0),
                                    axis=-1, keepdims=True)


def vae_attn_criterion(means, logvars, cmap_values_gt, cmap_values_hat, *,
                       lw_recon=1.0, lw_kld=1.0, alpha=3.0,
                       block_rows=None, block_cols=None):
    bs = cmap_values_gt.shape[0]
    npts = int(np.prod(cmap_values_gt.shape[1:]))
    gt = cmap_values_gt.reshape(bs, npts)
    hat = cmap_values_hat.reshape(bs, npts)
    means2 = means.reshape(bs, -1)
    logvars2 = logvars.reshape(bs, -1)
    z = means2.shape[1]

    gt_isize = np.dtype(gt.dtype).itemsize
    m_isize = np.dtype(means2.dtype).itemsize

    # ---- VMEM-aware tile sizing (64 MiB physical on v7x, 128 MiB v5e/v6e) ---
    vmem_cap = 64 << 20                        # conservative fallback
    try:
        info = pltpu.get_tpu_info()
        vmem_cap = int(getattr(info, "vmem_capacity_bytes", vmem_cap))
    except Exception:
        pass
    budget = vmem_cap // 4                     # for double-buffered gt/hat blocks

    sub = {4: 8, 2: 16, 1: 32}
    row_pack = max(sub.get(gt_isize, 8), sub.get(m_isize, 8))
    row_cap = 256                              # review: 64-256 rows per block
    if block_rows is not None:
        bt = _round_up(block_rows, row_pack)
    else:
        bt = min(row_cap, _round_up(bs, row_pack))
    num_bt = -(-bs // bt)

    per_col_bytes = 4 * bt * gt_isize          # gt+hat, double-buffered
    nt_cap = max(128, min(16384, (budget // per_col_bytes) // 128 * 128))
    if block_cols is not None:
        nt_cap = max(128, (block_cols // 128) * 128)
    if npts <= nt_cap:
        nt, num_nt = npts, 1                   # single full-width block
    else:
        nt = nt_cap
        num_nt = -(-npts // nt)

    # ---- optional outer "parallel" split of the N axis (v7x megacore) -------
    n_outer = 2 if (num_bt == 1 and num_nt >= 2) else 1
    n_inner = -(-num_nt // n_outer)
    has_dup = n_outer * n_inner > num_nt       # clamped overhang tiles
    ragged = num_nt * nt != npts               # partial last column tile
    need_mask = ragged or has_dup
    mask_start = (num_nt - 1) if ragged else num_nt

    if has_dup:
        def _col_block(o, i, j):
            return (i, jnp.minimum(o * n_inner + j, num_nt - 1))
    else:
        def _col_block(o, i, j):
            return (i, o * n_inner + j)

    def _row_block(o, i, j):
        return (i, 0)

    def _out_block(o, i, j):
        return (o * num_bt + i, 0)

    out_rows = n_outer * num_bt * bt           # full output blocks (tiny, fresh)

    kernel = functools.partial(_vae_attn_kernel, alpha=float(alpha),
                               n_valid=npts, nt=nt, n_inner=n_inner,
                               mask_start=mask_start, need_mask=need_mask)

    # Double-buffered blocks: gt + hat + means + logvars + small outputs.
    needed = 4 * bt * nt * gt_isize + 4 * bt * z * m_isize + 24 * bt + (1 << 20)
    vmem_limit = int(min(vmem_cap // 2, max(needed + (8 << 20), 32 << 20)))

    cost = pl.CostEstimate(
        flops=8 * bs * npts + 6 * bs * z,
        transcendentals=bs * npts + bs * z,
        bytes_accessed=(2 * bs * npts * gt_isize + 2 * bs * z * m_isize
                        + 12 * out_rows),
    )

    kld_rows, num_rows, den_rows = pl.pallas_call(
        kernel,
        grid_spec=pltpu.PrefetchScalarGridSpec(
            num_scalar_prefetch=0,
            grid=(n_outer, num_bt, n_inner),
            in_specs=[
                pl.BlockSpec((bt, z), _row_block),     # means
                pl.BlockSpec((bt, z), _row_block),     # logvars
                pl.BlockSpec((bt, nt), _col_block),    # cmap gt
                pl.BlockSpec((bt, nt), _col_block),    # cmap hat
            ],
            out_specs=[
                pl.BlockSpec((bt, 1), _out_block),     # per-row KLD
                pl.BlockSpec((bt, 1), _out_block),     # per-row sum(w * se)
                pl.BlockSpec((bt, 1), _out_block),     # per-row sum(w)
            ],
        ),
        out_shape=(
            jax.ShapeDtypeStruct((out_rows, 1), jnp.float32),
            jax.ShapeDtypeStruct((out_rows, 1), jnp.float32),
            jax.ShapeDtypeStruct((out_rows, 1), jnp.float32),
        ),
        compiler_params=pltpu.CompilerParams(
            dimension_semantics=("parallel", "parallel", "arbitrary"),
            vmem_limit_bytes=vmem_limit),
        cost_estimate=cost,
    )(means2, logvars2, gt, hat)

    # Tiny O(B) final reduction in plain JAX (keeps the grid megacore-shardable
    # and discards the garbage rows from partial batch blocks).
    rows = num_bt * bt
    loss_kld = jnp.mean(kld_rows.reshape(n_outer, rows)[0, :bs])
    num_ps = num_rows.reshape(n_outer, rows).sum(axis=0)[:bs]
    den_ps = den_rows.reshape(n_outer, rows).sum(axis=0)[:bs]
    loss_recon = jnp.mean(jnp.sqrt(num_ps / den_ps))
    loss = lw_kld * loss_kld + lw_recon * loss_recon
    return loss, loss_recon, loss_kld


def _reference(means, logvars, gt, hat, lw_recon, lw_kld, alpha):
    loss_kld = jnp.mean(
        -0.5 * jnp.sum(1.0 + logvars - means ** 2 - jnp.exp(logvars), axis=-1))
    se = jnp.square(gt - hat)
    aw = jnp.exp(gt * alpha)
    loss_recon = jnp.mean(jnp.sqrt(jnp.sum(se * aw, axis=1) / jnp.sum(aw, axis=1)))
    loss = lw_kld * loss_kld + lw_recon * loss_recon
    return loss, loss_recon, loss_kld


if __name__ == "__main__":
    # Deterministic "constructor" hyperparameters (module __init__ args).
    lw_init_recon = 1.0
    lw_init_kld = 0.5
    alpha = 3.0

    def _check(out, ref, rtol, atol):
        for got, want in zip(out, ref):
            assert jnp.allclose(got, want, rtol=rtol, atol=atol), (got, want)

    # --- primary test: small shapes, f32, single tile -------------------------
    B, Z, N = 2, 32, 128
    k1, k2, k3, k4 = jax.random.split(jax.random.PRNGKey(0), 4)
    means = jax.random.normal(k1, (B, Z), dtype=jnp.float32)
    logvars = 0.1 * jax.random.normal(k2, (B, Z), dtype=jnp.float32)
    cmap_gt = jax.nn.sigmoid(jax.random.normal(k3, (B, N), dtype=jnp.float32))
    cmap_hat = jax.nn.sigmoid(jax.random.normal(k4, (B, N), dtype=jnp.float32))

    out = vae_attn_criterion(means, logvars, cmap_gt, cmap_hat,
                             lw_recon=lw_init_recon, lw_kld=lw_init_kld,
                             alpha=alpha)
    jax.block_until_ready(out)
    ref = _reference(means, logvars, cmap_gt, cmap_hat,
                     lw_init_recon, lw_init_kld, alpha)
    _check(out, ref, 1e-5, 1e-5)

    # --- native-dtype (bf16) inputs: in-kernel cast, 16-row sublane packing ---
    out_bf16 = vae_attn_criterion(
        means.astype(jnp.bfloat16), logvars.astype(jnp.bfloat16),
        cmap_gt.astype(jnp.bfloat16), cmap_hat.astype(jnp.bfloat16),
        lw_recon=lw_init_recon, lw_kld=lw_init_kld, alpha=alpha)
    jax.block_until_ready(out_bf16)
    ref_bf16 = _reference(
        means.astype(jnp.bfloat16).astype(jnp.float32),
        logvars.astype(jnp.bfloat16).astype(jnp.float32),
        cmap_gt.astype(jnp.bfloat16).astype(jnp.float32),
        cmap_hat.astype(jnp.bfloat16).astype(jnp.float32),
        lw_init_recon, lw_init_kld, alpha)
    _check(out_bf16, ref_bf16, 1e-4, 1e-4)

    # --- non-aligned shapes, single wide tile, partial batch rows (no pad) ----
    B2, Z2, N2 = 10, 48, 1000
    k5, k6, k7, k8 = jax.random.split(jax.random.PRNGKey(1), 4)
    means2 = jax.random.normal(k5, (B2, Z2), dtype=jnp.float32)
    logvars2 = 0.1 * jax.random.normal(k6, (B2, Z2), dtype=jnp.float32)
    gt2 = jax.nn.sigmoid(jax.random.normal(k7, (B2, N2), dtype=jnp.float32))
    hat2 = jax.nn.sigmoid(jax.random.normal(k8, (B2, N2), dtype=jnp.float32))
    out2 = vae_attn_criterion(means2, logvars2, gt2, hat2,
                              lw_recon=lw_init_recon, lw_kld=lw_init_kld,
                              alpha=alpha)
    jax.block_until_ready(out2)
    _check(out2, _reference(means2, logvars2, gt2, hat2,
                            lw_init_recon, lw_init_kld, alpha), 1e-4, 1e-4)

    # --- forced multi-tile N: ragged last tile + outer megacore split + clamped
    #     duplicate tile (block_cols test knob) ---------------------------------
    B3, Z3, N3 = 2, 32, 1280
    k9, k10 = jax.random.split(jax.random.PRNGKey(2), 2)
    gt3 = jax.nn.sigmoid(jax.random.normal(k9, (B3, N3), dtype=jnp.float32))
    hat3 = jax.nn.sigmoid(jax.random.normal(k10, (B3, N3), dtype=jnp.float32))
    out3 = vae_attn_criterion(means, logvars, gt3, hat3,
                              lw_recon=lw_init_recon, lw_kld=lw_init_kld,
                              alpha=alpha, block_cols=512)
    jax.block_until_ready(out3)
    _check(out3, _reference(means, logvars, gt3, hat3,
                            lw_init_recon, lw_init_kld, alpha), 1e-4, 1e-4)

    # --- forced multi-tile batch + multi-tile N, both ragged ------------------
    B4, Z4, N4 = 20, 32, 1100
    k11, k12, k13, k14 = jax.random.split(jax.random.PRNGKey(3), 4)
    means4 = jax.random.normal(k11, (B4, Z4), dtype=jnp.float32)
    logvars4 = 0.1 * jax.random.normal(k12, (B4, Z4), dtype=jnp.float32)
    gt4 = jax.nn.sigmoid(jax.random.normal(k13, (B4, N4), dtype=jnp.float32))
    hat4 = jax.nn.sigmoid(jax.random.normal(k14, (B4, N4), dtype=jnp.float32))
    out4 = vae_attn_criterion(means4, logvars4, gt4, hat4,
                              lw_recon=lw_init_recon, lw_kld=lw_init_kld,
                              alpha=alpha, block_rows=8, block_cols=512)
    jax.block_until_ready(out4)
    _check(out4, _reference(means4, logvars4, gt4, hat4,
                            lw_init_recon, lw_init_kld, alpha), 1e-4, 1e-4)

    print("KERNEL_OK")
</pallas_src>

<mosaic_0001>
module attributes {stable_mosaic.version = 11 : i64} {
  func.func @_vae_attn_kernel(%arg0: i32, %arg1: i32, %arg2: i32, %arg3: memref<8x32xf32, #tpu.memory_space<vmem>>, %arg4: memref<8x32xf32, #tpu.memory_space<vmem>>, %arg5: memref<8x128xf32, #tpu.memory_space<vmem>>, %arg6: memref<8x128xf32, #tpu.memory_space<vmem>>, %arg7: memref<8x1xf32, #tpu.memory_space<vmem>>, %arg8: memref<8x1xf32, #tpu.memory_space<vmem>>, %arg9: memref<8x1xf32, #tpu.memory_space<vmem>>) attributes {dimension_semantics = [#tpu.dimension_semantics<parallel>, #tpu.dimension_semantics<parallel>, #tpu.dimension_semantics<arbitrary>], iteration_bounds = array<i64: 1, 1, 1>, scalar_prefetch = 0 : i64, scratch_operands = 0 : i64, tpu.core_type = #tpu.core_type<tc>, window_params = [{transform_indices = @transform_0, window_bounds = array<i64: 8, 32>}, {transform_indices = @transform_1, window_bounds = array<i64: 8, 32>}, {transform_indices = @transform_2, window_bounds = array<i64: 8, 128>}, {transform_indices = @transform_3, window_bounds = array<i64: 8, 128>}, {transform_indices = @transform_4, window_bounds = array<i64: 8, 1>}, {transform_indices = @transform_5, window_bounds = array<i64: 8, 1>}, {transform_indices = @transform_6, window_bounds = array<i64: 8, 1>}]} {
    %c0_i32 = arith.constant 0 : i32
    %0 = arith.cmpi eq, %arg2, %c0_i32 : i32
    %1 = arith.extui %0 : i1 to i32
    %c0_i32_0 = arith.constant 0 : i32
    %2 = arith.cmpi ne, %1, %c0_i32_0 : i32
    scf.if %2 {
      %c0_14 = arith.constant 0 : index
      %c0_15 = arith.constant 0 : index
      %21 = vector.load %arg3[%c0_14, %c0_15] : memref<8x32xf32, #tpu.memory_space<vmem>>, vector<8x32xf32>
      %c0_16 = arith.constant 0 : index
      %c0_17 = arith.constant 0 : index
      %22 = vector.load %arg4[%c0_16, %c0_17] : memref<8x32xf32, #tpu.memory_space<vmem>>, vector<8x32xf32>
      %cst_18 = arith.constant 1.000000e+00 : f32
      %23 = vector.broadcast %cst_18 : f32 to vector<8x32xf32>
      %24 = arith.addf %23, %22 : vector<8x32xf32>
      %25 = arith.mulf %21, %21 : vector<8x32xf32>
      %26 = arith.subf %24, %25 : vector<8x32xf32>
      %27 = math.exp %22 : vector<8x32xf32>
      %28 = arith.subf %26, %27 : vector<8x32xf32>
      %cst_19 = arith.constant dense<0.000000e+00> : vector<8xf32>
      %29 = vector.multi_reduction <add>, %28, %cst_19 [1] : vector<8x32xf32> to vector<8xf32>
      %30 = vector.shape_cast %29 : vector<8xf32> to vector<8x1xf32>
      %cst_20 = arith.constant -5.000000e-01 : f32
      %31 = vector.broadcast %cst_20 : f32 to vector<8x1xf32>
      %32 = arith.mulf %31, %30 : vector<8x1xf32>
      %c0_21 = arith.constant 0 : index
      %c0_22 = arith.constant 0 : index
      %33 = vector.load %arg7[%c0_21, %c0_22] : memref<8x1xf32, #tpu.memory_space<vmem>>, vector<8x1xf32>
      tpu.vector_store %arg7[%c0_21, %c0_22], %32 {strides = array<i32>} : memref<8x1xf32, #tpu.memory_space<vmem>>, vector<8x1xf32>,
      %cst_23 = arith.constant 0.000000e+00 : f32
      %34 = vector.broadcast %cst_23 : f32 to vector<8x1xf32>
      %c0_24 = arith.constant 0 : index
      %c0_25 = arith.constant 0 : index
      %35 = vector.load %arg8[%c0_24, %c0_25] : memref<8x1xf32, #tpu.memory_space<vmem>>, vector<8x1xf32>
      tpu.vector_store %arg8[%c0_24, %c0_25], %34 {strides = array<i32>} : memref<8x1xf32, #tpu.memory_space<vmem>>, vector<8x1xf32>,
      %cst_26 = arith.constant 0.000000e+00 : f32
      %36 = vector.broadcast %cst_26 : f32 to vector<8x1xf32>
      %c0_27 = arith.constant 0 : index
      %c0_28 = arith.constant 0 : index
      %37 = vector.load %arg9[%c0_27, %c0_28] : memref<8x1xf32, #tpu.memory_space<vmem>>, vector<8x1xf32>
      tpu.vector_store %arg9[%c0_27, %c0_28], %36 {strides = array<i32>} : memref<8x1xf32, #tpu.memory_space<vmem>>, vector<8x1xf32>,
    } else {
    }
    %c0 = arith.constant 0 : index
    %c0_1 = arith.constant 0 : index
    %3 = vector.load %arg5[%c0, %c0_1] : memref<8x128xf32, #tpu.memory_space<vmem>>, vector<8x128xf32>
    %c0_2 = arith.constant 0 : index
    %c0_3 = arith.constant 0 : index
    %4 = vector.load %arg6[%c0_2, %c0_3] : memref<8x128xf32, #tpu.memory_space<vmem>>, vector<8x128xf32>
    %5 = arith.subf %3, %4 : vector<8x128xf32>
    %cst = arith.constant 3.000000e+00 : f32
    %6 = vector.broadcast %cst : f32 to vector<8x128xf32>
    %7 = arith.mulf %3, %6 : vector<8x128xf32>
    %8 = math.exp %7 : vector<8x128xf32>
    %9 = arith.mulf %5, %5 : vector<8x128xf32>
    %10 = arith.mulf %9, %8 : vector<8x128xf32>
    %c0_4 = arith.constant 0 : index
    %c0_5 = arith.constant 0 : index
    %11 = vector.load %arg8[%c0_4, %c0_5] : memref<8x1xf32, #tpu.memory_space<vmem>>, vector<8x1xf32>
    %cst_6 = arith.constant dense<0.000000e+00> : vector<8xf32>
    %12 = vector.multi_reduction <add>, %10, %cst_6 [1] : vector<8x128xf32> to vector<8xf32>
    %13 = vector.shape_cast %12 : vector<8xf32> to vector<8x1xf32>
    %14 = arith.addf %11, %13 : vector<8x1xf32>
    %c0_7 = arith.constant 0 : index
    %c0_8 = arith.constant 0 : index
    %15 = vector.load %arg8[%c0_7, %c0_8] : memref<8x1xf32, #tpu.memory_space<vmem>>, vector<8x1xf32>
    tpu.vector_store %arg8[%c0_7, %c0_8], %14 {strides = array<i32>} : memref<8x1xf32, #tpu.memory_space<vmem>>, vector<8x1xf32>,
    %c0_9 = arith.constant 0 : index
    %c0_10 = arith.constant 0 : index
    %16 = vector.load %arg9[%c0_9, %c0_10] : memref<8x1xf32, #tpu.memory_space<vmem>>, vector<8x1xf32>
    %cst_11 = arith.constant dense<0.000000e+00> : vector<8xf32>
    %17 = vector.multi_reduction <add>, %8, %cst_11 [1] : vector<8x128xf32> to vector<8xf32>
    %18 = vector.shape_cast %17 : vector<8xf32> to vector<8x1xf32>
    %19 = arith.addf %16, %18 : vector<8x1xf32>
    %c0_12 = arith.constant 0 : index
    %c0_13 = arith.constant 0 : index
    %20 = vector.load %arg9[%c0_12, %c0_13] : memref<8x1xf32, #tpu.memory_space<vmem>>, vector<8x1xf32>
    tpu.vector_store %arg9[%c0_12, %c0_13], %19 {strides = array<i32>} : memref<8x1xf32, #tpu.memory_space<vmem>>, vector<8x1xf32>,
    return
  }
  func.func @transform_0(%arg0: i32, %arg1: i32, %arg2: i32) -> (i32, i32) {
    %c0_i32 = arith.constant 0 : i32
    %c0_i32_0 = arith.constant 0 : i32
    return %arg1, %c0_i32 : i32, i32
  }
  func.func @transform_1(%arg0: i32, %arg1: i32, %arg2: i32) -> (i32, i32) {
    %c0_i32 = arith.constant 0 : i32
    %c0_i32_0 = arith.constant 0 : i32
    return %arg1, %c0_i32 : i32, i32
  }
  func.func @transform_2(%arg0: i32, %arg1: i32, %arg2: i32) -> (i32, i32) {
    %c1_i32 = arith.constant 1 : i32
    %0 = arith.muli %arg0, %c1_i32 : i32
    %1 = arith.addi %0, %arg2 : i32
    %c0_i32 = arith.constant 0 : i32
    return %arg1, %1 : i32, i32
  }
  func.func @transform_3(%arg0: i32, %arg1: i32, %arg2: i32) -> (i32, i32) {
    %c1_i32 = arith.constant 1 : i32
    %0 = arith.muli %arg0, %c1_i32 : i32
    %1 = arith.addi %0, %arg2 : i32
    %c0_i32 = arith.constant 0 : i32
    return %arg1, %1 : i32, i32
  }
  func.func @transform_4(%arg0: i32, %arg1: i32, %arg2: i32) -> (i32, i32) {
    %c1_i32 = arith.constant 1 : i32
    %0 = arith.muli %arg0, %c1_i32 : i32
    %1 = arith.addi %0, %arg1 : i32
    %c0_i32 = arith.constant 0 : i32
    %c0_i32_0 = arith.constant 0 : i32
    return %1, %c0_i32 : i32, i32
  }
  func.func @transform_5(%arg0: i32, %arg1: i32, %arg2: i32) -> (i32, i32) {
    %c1_i32 = arith.constant 1 : i32
    %0 = arith.muli %arg0, %c1_i32 : i32
    %1 = arith.addi %0, %arg1 : i32
    %c0_i32 = arith.constant 0 : i32
    %c0_i32_0 = arith.constant 0 : i32
    return %1, %c0_i32 : i32, i32
  }
  func.func @transform_6(%arg0: i32, %arg1: i32, %arg2: i32) -> (i32, i32) {
    %c1_i32 = arith.constant 1 : i32
    %0 = arith.muli %arg0, %c1_i32 : i32
    %1 = arith.addi %0, %arg1 : i32
    %c0_i32 = arith.constant 0 : i32
    %c0_i32_0 = arith.constant 0 : i32
    return %1, %c0_i32 : i32, i32
  }
}

</mosaic_0001>

<llo_original>
// kernel: tpu_custom_call.1
$region0: #{tpu_custom_call.1}
  #allocation0 [shape = 'u32[]', space=smem, size = 0x4, offset = 0x4, fixed_abs, tag = 'smem constant byte address 0x4 - core index']
  #allocation1 [shape = 'u32[144,128]{1,0:T(1,128)}', space=vmem, size = 0x12000, scoped, tag = 'internal scratch']
  %s0 = inlined_call_operand.hbm [shape: f32[2,32], index: 0, kind: input, shape index: {}]
  %s1 = inlined_call_operand.hbm [shape: f32[2,32], index: 1, kind: input, shape index: {}]
  %s2 = inlined_call_operand.vmem [shape: f32[2,128], index: 2, kind: input, shape index: {}]
  %s3 = inlined_call_operand.vmem [shape: f32[2,128], index: 3, kind: input, shape index: {}]
  %s4 = inlined_call_operand.vmem [shape: f32[8,1], index: 4, kind: output, shape index: {0}]
  %s5 = inlined_call_operand.vmem [shape: f32[8,1], index: 5, kind: output, shape index: {1}]
  %s6 = inlined_call_operand.vmem [shape: f32[8,1], index: 6, kind: output, shape index: {2}]
  %7 = xla_tuple %s4, %s5, %s6
  %s8 = sld [smem:[#allocation0]]
  $region54: #{tpu_custom_call.1} parent=0
    _
  %s10 = ssub.s32 1, %s8
  %s11 = scalar_select 0, %s10, %s8
  $region1: #{tpu_custom_call.1} parent=0
    #allocation2 [shape = 'u8[4096]{0}', space=vmem, size = 0x1000, scoped, tag = 'input window, operand 0, single buffered']
    #allocation3 [shape = 's32[1]{0}', space=sflag, size = 0x4, scoped, tag = 'scoped memory for tpu_custom_call.1']
    #allocation4 [shape = 'u8[4096]{0}', space=vmem, size = 0x1000, scoped, tag = 'input window, operand 1, single buffered']
    #allocation5 [shape = 's32[1]{0}', space=sflag, size = 0x4, scoped, tag = 'scoped memory for tpu_custom_call.1']
    %12 = vsyncpa [#allocation3], 0
    %13 = vsyncpa [#allocation5], 0
    // Predicated region
    $region2: #{tpu_custom_call.1} parent=1 // pred_check
      _
    $region3: #{tpu_custom_call.1} parent=1 // pred_check_branch
      %15 = sbr.rel (0) target = $region5
    $region4: #{tpu_custom_call.1} parent=1 // pred_region
      %s17 = ssub.s32 128, 32
      %18 = vsyncadd [#allocation3], %s17
      %s19 = sshll.u32 [#allocation2], 4
      %s20 = int_to_ptr.vmem [resolvable:$true] %s19
      %25 = dma.hbm_to_vmem [thread:$0]  %s0, 32, %s20, [#allocation3], 32, 32, 2
    $region5: #{tpu_custom_call.1} parent=1 // pred_fallthru
      _
    // Predicated region
    $region6: #{tpu_custom_call.1} parent=1 // pred_check
      _
    $region7: #{tpu_custom_call.1} parent=1 // pred_check_branch
      %27 = sbr.rel (0) target = $region9
    $region8: #{tpu_custom_call.1} parent=1 // pred_region
      %s29 = ssub.s32 128, 32
      %30 = vsyncadd [#allocation5], %s29
      %s31 = sshll.u32 [#allocation4], 4
      %s32 = int_to_ptr.vmem [resolvable:$true] %s31
      %37 = dma.hbm_to_vmem [thread:$0]  %s1, 32, %s32, [#allocation5], 32, 32, 2
    $region9: #{tpu_custom_call.1} parent=1 // pred_fallthru
      _
    // Predicated region
    $region10: #{tpu_custom_call.1} parent=1 // pred_check
      _
    $region11: #{tpu_custom_call.1} parent=1 // pred_check_branch
      %39 = sbr.rel (0) target = $region13
    $region12: #{tpu_custom_call.1} parent=1 // pred_region
      %s40 = sadd.s32 0, 0
      %p41 = scmp.lt.s32.totalorder %s40, 0
      %s42 = scalar_select %p41, %s40, 0
      %s43 = smul.addr %s42, 2
      %s44 = scalar_lea.vmem %s2, %s43
      %s45 = sadd.s32 0, 0
    $region13: #{tpu_custom_call.1} parent=1 // pred_fallthru
      _
    // Predicated region
    $region14: #{tpu_custom_call.1} parent=1 // pred_check
      _
    $region15: #{tpu_custom_call.1} parent=1 // pred_check_branch
      %47 = sbr.rel (0) target = $region17
    $region16: #{tpu_custom_call.1} parent=1 // pred_region
      %s48 = sadd.s32 0, 0
      %p49 = scmp.lt.s32.totalorder %s48, 0
      %s50 = scalar_select %p49, %s48, 0
      %s51 = smul.addr %s50, 2
      %s52 = scalar_lea.vmem %s3, %s51
      %s53 = sadd.s32 0, 0
    $region17: #{tpu_custom_call.1} parent=1 // pred_fallthru
      _
    // Predicated region
    $region18: #{tpu_custom_call.1} parent=1 // pred_check
      _
    $region19: #{tpu_custom_call.1} parent=1 // pred_check_branch
      %55 = sbr.rel (0) target = $region21
    $region20: #{tpu_custom_call.1} parent=1 // pred_region
      %56 = dma.done [#allocation3], 128
    $region21: #{tpu_custom_call.1} parent=1 // pred_fallthru
      _
    // Predicated region
    $region22: #{tpu_custom_call.1} parent=1 // pred_check
      _
    $region23: #{tpu_custom_call.1} parent=1 // pred_check_branch
      %58 = sbr.rel (0) target = $region25
    $region24: #{tpu_custom_call.1} parent=1 // pred_region
      %59 = dma.done [#allocation5], 128
    $region25: #{tpu_custom_call.1} parent=1 // pred_fallthru
      _
    %s60 = sadd.s32 0, 0
    %p61 = scmp.lt.s32.totalorder %s60, 0
    %s62 = scalar_select %p61, %s60, 0
    %s63 = smul.addr %s62, 2
    %s64 = scalar_lea.vmem %s2, %s63
    %s65 = sadd.s32 0, 0
    %p66 = scmp.lt.s32.totalorder %s65, 0
    %s67 = scalar_select %p66, %s65, 0
    %s68 = smul.addr %s67, 2
    %s69 = scalar_lea.vmem %s3, %s68
    %s70 = sadd.s32 0, 0
    %p71 = scmp.lt.s32.totalorder %s70, 0
    %s72 = scalar_select %p71, %s70, 0
    %s73 = smul.addr %s72, 8
    %s74 = scalar_lea.vmem %s4, %s73
    %s75 = sadd.s32 0, 0
    %p76 = scmp.lt.s32.totalorder %s75, 0
    %s77 = scalar_select %p76, %s75, 0
    %s78 = smul.addr %s77, 8
    %s79 = scalar_lea.vmem %s5, %s78
    %s80 = sadd.s32 0, 0
    %p81 = scmp.lt.s32.totalorder %s80, 0
    %s82 = scalar_select %p81, %s80, 0
    %s83 = smul.addr %s82, 8
    %s84 = scalar_lea.vmem %s6, %s83
    %s85 = sadd.s32 0, 0
    %p86 = scmp.lt.s32.totalorder %s85, 0
    %s87 = scalar_select %p86, %s85, 0
    %s88 = smul.addr %s87, 2
    %s89 = scalar_lea.vmem %s2, %s88
    %s90 = sadd.s32 0, 0
    %s91 = sadd.s32 0, 0
    %p92 = scmp.lt.s32.totalorder %s91, 0
    %s93 = scalar_select %p92, %s91, 0
    %s94 = smul.addr %s93, 2
    %s95 = scalar_lea.vmem %s3, %s94
    %s96 = sadd.s32 0, 0
    %s97 = sadd.s32 0, 0
    %p98 = scmp.lt.s32.totalorder %s97, 0
    %s99 = scalar_select %p98, %s97, 0
    %s100 = smul.addr %s99, 8
    %s101 = scalar_lea.vmem %s4, %s100
    %s102 = sadd.s32 0, 0
    %s103 = sadd.s32 0, 0
    %p104 = scmp.lt.s32.totalorder %s103, 0
    %s105 = scalar_select %p104, %s103, 0
    %s106 = smul.addr %s105, 8
    %s107 = scalar_lea.vmem %s5, %s106
    %s108 = sadd.s32 0, 0
    %s109 = sadd.s32 0, 0
    %p110 = scmp.lt.s32.totalorder %s109, 0
    %s111 = scalar_select %p110, %s109, 0
    %s112 = smul.addr %s111, 8
    %s113 = scalar_lea.vmem %s6, %s112
    %s114 = sadd.s32 0, 0
    %p115 = scmp.eq.s32.totalorder 0, 0
    // Predicated region
    $region26: #{tpu_custom_call.1} parent=1 // pred_check
      %p116 = pneg %p115
    $region27: #{tpu_custom_call.1} parent=1 // pred_check_branch
      %118 = sbr.rel (%p116) target = $region29
    $region28: #{tpu_custom_call.1} parent=1 // pred_region
      %v119 = vld [vmem:[#allocation2] sm:$0xff]
      %v120 = vld [vmem:[#allocation4] sm:$0xff]
      %v121 = vadd.f32 %v120, 1.0
      %v122 = vmul.f32 %v119, %v119
      %v123 = vsub.f32 %v121, %v122
      %v124 = vmul.f32 %v120, 1.442695
      %v125 = vpow.pop %v124
      %v126 = vsub.f32 %v123, %v125
      %vm127 = vcmask 261120
      %v128 = vsel %vm127, %v126, 0.0
      %129 = vadd.xlane.f32.xlu0 %v128
      %v130 = vpop.xlane.xlu0 %129
      %v131 = vmul.f32 %v130, -0.5
      %vm132 = vcmask 7168
      %133 = vst.msk [vmem:[%s101] sm:$0xff] %vm132, %v131
      %134 = vst.msk [vmem:[%s107] sm:$0xff] %vm132, 0.0
      %135 = vst.msk [vmem:[%s113] sm:$0xff] %vm132, 0.0
    $region29: #{tpu_custom_call.1} parent=1 // pred_fallthru
      _
    %v136 = vld [vmem:[%s89] sm:$0xff]
    %v137 = vld [vmem:[%s95] sm:$0xff]
    %v138 = vsub.f32 %v136, %v137
    %v139 = vmul.f32 %v136, 3.0
    %v140 = vmul.f32 %v139, 1.442695
    %v141 = vpow.pop %v140
    %v142 = vmul.f32 %v138, %v138
    %v143 = vmul.f32 %v142, %v141
    %v144 = vld [vmem:[%s107] sm:$0xff]
    %145 = vadd.xlane.f32.xlu0 %v143
    %v146 = vpop.xlane.xlu0 %145
    %v147 = vadd.f32 %v144, %v146
    %vm148 = vcmask 7168
    %149 = vst.msk [vmem:[%s107] sm:$0xff] %vm148, %v147
    %v150 = vld [vmem:[%s113] sm:$0xff]
    %151 = vadd.xlane.f32.xlu0 %v141
    %v152 = vpop.xlane.xlu0 %151
    %v153 = vadd.f32 %v150, %v152
    %154 = vst.msk [vmem:[%s113] sm:$0xff] %vm148, %v153
    %s155 = sadd.s32 0, 0
    %p156 = scmp.lt.s32.totalorder %s155, 0
    %s157 = scalar_select %p156, %s155, 0
    %s158 = smul.addr %s157, 8
    %s159 = scalar_lea.vmem %s4, %s158
    %s160 = sadd.s32 0, 0
    %p161 = scmp.lt.s32.totalorder %s160, 0
    %s162 = scalar_select %p161, %s160, 0
    %s163 = smul.addr %s162, 8
    %s164 = scalar_lea.vmem %s5, %s163
    %s165 = sadd.s32 0, 0
    %p166 = scmp.lt.s32.totalorder %s165, 0
    %s167 = scalar_select %p166, %s165, 0
    %s168 = smul.addr %s167, 8
    %s169 = scalar_lea.vmem %s6, %s168
    // Predicated region
    $region30: #{tpu_custom_call.1} parent=1 // pred_check
      _
    $region31: #{tpu_custom_call.1} parent=1 // pred_check_branch
      %171 = sbr.rel (0) target = $region33
    $region32: #{tpu_custom_call.1} parent=1 // pred_region
      %s172 = sadd.s32 0, 0
    $region33: #{tpu_custom_call.1} parent=1 // pred_fallthru
      _
    // Predicated region
    $region34: #{tpu_custom_call.1} parent=1 // pred_check
      _
    $region35: #{tpu_custom_call.1} parent=1 // pred_check_branch
      %174 = sbr.rel (0) target = $region37
    $region36: #{tpu_custom_call.1} parent=1 // pred_region
      %s175 = sadd.s32 0, 0
    $region37: #{tpu_custom_call.1} parent=1 // pred_fallthru
      _
    // Predicated region
    $region38: #{tpu_custom_call.1} parent=1 // pred_check
      _
    $region39: #{tpu_custom_call.1} parent=1 // pred_check_branch
      %177 = sbr.rel (0) target = $region41
    $region40: #{tpu_custom_call.1} parent=1 // pred_region
      %s178 = sadd.s32 0, 0
    $region41: #{tpu_custom_call.1} parent=1 // pred_fallthru
      _
    // Predicated region
    $region42: #{tpu_custom_call.1} parent=1 // pred_check
      _
    $region43: #{tpu_custom_call.1} parent=1 // pred_check_branch
      %180 = sbr.rel (0) target = $region45
    $region44: #{tpu_custom_call.1} parent=1 // pred_region
      %s181 = sadd.s32 0, 0
      %p182 = scmp.lt.s32.totalorder %s181, 0
      %s183 = scalar_select %p182, %s181, 0
      %s184 = smul.addr %s183, 8
      %s185 = scalar_lea.vmem %s4, %s184
    $region45: #{tpu_custom_call.1} parent=1 // pred_fallthru
      _
    // Predicated region
    $region46: #{tpu_custom_call.1} parent=1 // pred_check
      _
    $region47: #{tpu_custom_call.1} parent=1 // pred_check_branch
      %187 = sbr.rel (0) target = $region49
    $region48: #{tpu_custom_call.1} parent=1 // pred_region
      %s188 = sadd.s32 0, 0
      %p189 = scmp.lt.s32.totalorder %s188, 0
      %s190 = scalar_select %p189, %s188, 0
      %s191 = smul.addr %s190, 8
      %s192 = scalar_lea.vmem %s5, %s191
    $region49: #{tpu_custom_call.1} parent=1 // pred_fallthru
      _
    // Predicated region
    $region50: #{tpu_custom_call.1} parent=1 // pred_check
      _
    $region51: #{tpu_custom_call.1} parent=1 // pred_check_branch
      %194 = sbr.rel (0) target = $region53
    $region52: #{tpu_custom_call.1} parent=1 // pred_region
      %s195 = sadd.s32 0, 0
      %p196 = scmp.lt.s32.totalorder %s195, 0
      %s197 = scalar_select %p196, %s195, 0
      %s198 = smul.addr %s197, 8
      %s199 = scalar_lea.vmem %s6, %s198
    $region53: #{tpu_custom_call.1} parent=1 // pred_fallthru
      _
    %200 = vsyncpa [#allocation3], 1
    %201 = vsyncpa [#allocation5], 1

</llo_original>
